<compile_context>
chip_gen: v7x
topology: tpu7x:2x2x1
jax: 0.10.0
libtpu: 0.0.40
codegen_flags: <defaults>
</compile_context>

<pallas_src>
import functools
import math

import jax
import jax.numpy as jnp
import numpy as np
from jax.experimental import pallas as pl
from jax.experimental.pallas import tpu as pltpu

_DEFAULT_BLOCK_T = 256  # history rows per grid step (kept a multiple of 8)


def _attention_kernel(hs_ref, h_ref, wbT_ref, wsT_ref, bsig_ref,
                      out_ref, denom_ref, *, t_valid, ts, needs_mask):
    """One grid step over a [B, ts, H] tile of the (padded) hidden history.

    hs_ref    : [B, ts, H]  history tile (current hidden already appended)
    h_ref     : [B, H]      current hidden
    wbT_ref   : [H, H]      W_beta^T  (prepared once, [in, out] layout)
    wsT_ref   : [H, H]      W_sigma^T
    bsig_ref  : [1, H]      sigma bias
    out_ref   : [B, H]      beta * hidden   (written on the last grid step)
    denom_ref : [B, H]      VMEM scratch: running sum_t exp(h_t @ W_beta^T)
    """
    kt = pl.program_id(0)

    @pl.when(kt == 0)
    def _init():
        denom_ref[...] = jnp.zeros_like(denom_ref)

    B, _, H = hs_ref.shape
    hs = hs_ref[...]                                            # [B, ts, H] f32
    wbT = wbT_ref[...]                                          # [H, H]

    # Batched MXU matmul over the aligned tile: logits[b, t, :] = h_t @ W_beta^T.
    logits = jnp.einsum("bth,bhk->btk", hs,
                        jnp.broadcast_to(wbT, (B, H, H)),
                        preferred_element_type=jnp.float32)     # [B, ts, H]
    e = jnp.exp(logits)
    if needs_mask:
        # Rows >= t_valid are zero-padding added by the wrapper; mask them so
        # they contribute 0 to the running exp-sum (sublane iota, lane-dense).
        row = kt * ts + jax.lax.broadcasted_iota(jnp.int32, (ts, H), 0)
        e = jnp.where(row < t_valid, e, 0.0)
    denom_ref[...] += jnp.sum(e, axis=1)                        # [B, H]

    @pl.when(kt == pl.num_programs(0) - 1)
    def _finalize():
        h = h_ref[...]                                          # [B, H]
        sigma = jnp.tanh(
            jnp.dot(h, wsT_ref[...], preferred_element_type=jnp.float32)
            + bsig_ref[...])                                    # tanh(Linear_sigma(h))
        num = jnp.exp(jnp.dot(sigma, wbT,
                              preferred_element_type=jnp.float32))
        out_ref[...] = (num / denom_ref[...] * h).astype(out_ref.dtype)


def _round_up(x, m):
    return (x + m - 1) // m * m


def prepare_params(w_sigma, b_sigma, w_beta):
    """One-time parameter prep: torch [out, in] -> kernel [in, out] layout."""
    wbT = jnp.asarray(w_beta, jnp.float32).T
    wsT = jnp.asarray(w_sigma, jnp.float32).T
    b_row = jnp.asarray(b_sigma, jnp.float32).reshape(1, -1)
    return wbT, wsT, b_row


@functools.partial(jax.jit, static_argnames=("block_t",))
def attention_forward(hiddens_prev, hidden, wbT, wsT, b_row,
                      block_t=_DEFAULT_BLOCK_T):
    """Forward pass of Attention.forward(hiddens, hidden).

    hiddens_prev : [B, T-1, H]  previously collected hiddens
    hidden       : [B, H]       current hidden (appended to the history, as in torch)
    returns      : [B, 1, H]
    """
    B, Tm1, H = hiddens_prev.shape
    T = Tm1 + 1
    # torch's `hiddens.append(hidden)` done host-side, once.
    hs_all = jnp.concatenate([hiddens_prev, hidden[:, None, :]], axis=1)  # [B, T, H]

    ts = max(8, _round_up(min(block_t, T), 8))      # sublane-aligned T tile
    Tp = _round_up(T, ts)
    if Tp != T:                                     # zero rows, masked in-kernel
        hs_all = jnp.pad(hs_all, ((0, 0), (0, Tp - T), (0, 0)))

    kernel = functools.partial(_attention_kernel, t_valid=T, ts=ts,
                               needs_mask=(Tp != T))
    # T axis is a reduction (denominator accumulated in VMEM scratch); default
    # "arbitrary" sequential grid semantics are exactly what we need.
    out = pl.pallas_call(
        kernel,
        out_shape=jax.ShapeDtypeStruct((B, H), jnp.float32),
        grid=(Tp // ts,),
        in_specs=[
            pl.BlockSpec((B, ts, H), lambda kt: (0, kt, 0)),   # history tile
            pl.BlockSpec((B, H), lambda kt: (0, 0)),           # current hidden
            pl.BlockSpec((H, H), lambda kt: (0, 0)),           # W_beta^T (resident)
            pl.BlockSpec((H, H), lambda kt: (0, 0)),           # W_sigma^T (resident)
            pl.BlockSpec((1, H), lambda kt: (0, 0)),           # sigma bias
        ],
        out_specs=pl.BlockSpec((B, H), lambda kt: (0, 0)),     # lane-dense 2-D store
        scratch_shapes=[pltpu.VMEM((B, H), jnp.float32)],      # running exp-sum
    )(hs_all, hidden, wbT, wsT, b_row)
    return out[:, None, :]                                      # free reshape


def _reference(hiddens_prev, hidden, w_sigma, b_sigma, w_beta):
    """Pure-JAX mirror of the PyTorch forward (HIGHEST-precision f32 matmuls)."""
    hp = jax.lax.Precision.HIGHEST
    hs = jnp.concatenate([hiddens_prev, hidden[:, None, :]], axis=1)
    sigma = jnp.tanh(jnp.dot(hidden, w_sigma.T, precision=hp) + b_sigma)
    denom = jnp.sum(jnp.exp(jnp.einsum("bth,oh->bto", hs, w_beta, precision=hp)),
                    axis=1)
    beta = jnp.exp(jnp.dot(sigma, w_beta.T, precision=hp)) / denom
    return (beta * hidden)[:, None, :]


if __name__ == "__main__":
    B, H = 2, 32

    key = jax.random.PRNGKey(0)
    k_hs, k_h, k_ws, k_bs, k_wb, k_hs2, k_h2 = jax.random.split(key, 7)

    # Parameter init matching _reset_parameters: U(-stdv, stdv), stdv = 1/sqrt(H)
    stdv = 1.0 / math.sqrt(H)
    w_sigma = jax.random.uniform(k_ws, (H, H), minval=-stdv, maxval=stdv,
                                 dtype=jnp.float32)
    b_sigma = jax.random.uniform(k_bs, (H,), minval=-stdv, maxval=stdv,
                                 dtype=jnp.float32)
    w_beta = jax.random.uniform(k_wb, (H, H), minval=-stdv, maxval=stdv,
                                dtype=jnp.float32)

    # One-time weight prep (NOT in the per-call path).
    wbT, wsT, b_row = prepare_params(w_sigma, b_sigma, w_beta)

    # Tolerance budget: the kernel runs its (tiny) matmuls at DEFAULT MXU
    # precision (per perf review) while the reference uses HIGHEST f32; at
    # these magnitudes that is at most a ~1e-3-level relative difference, so
    # rtol=1e-2 has ample margin.  exp/tanh match to ~1e-6 and the divide is
    # exact on both sides.
    rtol, atol = 1e-2, 1e-4

    # ---- case 1: T = 8 (no padding, single grid step) ----------------------
    T_prev = 7
    hiddens_prev = jax.random.normal(k_hs, (B, T_prev, H), dtype=jnp.float32)
    hidden = jax.random.normal(k_h, (B, H), dtype=jnp.float32)
    out = jax.block_until_ready(
        attention_forward(hiddens_prev, hidden, wbT, wsT, b_row))
    ref = _reference(hiddens_prev, hidden, w_sigma, b_sigma, w_beta)
    assert out.shape == (B, 1, H), out.shape
    np.testing.assert_allclose(np.asarray(out), np.asarray(ref),
                               rtol=rtol, atol=atol,
                               err_msg="full-forward mismatch vs reference (T=8)")

    # ---- case 2: T = 13 -> padded to 16, two grid steps of 8 rows -----------
    # Exercises the zero-pad row mask and the cross-step denominator scratch.
    T_prev2 = 12
    hiddens_prev2 = jax.random.normal(k_hs2, (B, T_prev2, H), dtype=jnp.float32)
    hidden2 = jax.random.normal(k_h2, (B, H), dtype=jnp.float32)
    out2 = jax.block_until_ready(
        attention_forward(hiddens_prev2, hidden2, wbT, wsT, b_row, block_t=8))
    ref2 = _reference(hiddens_prev2, hidden2, w_sigma, b_sigma, w_beta)
    assert out2.shape == (B, 1, H), out2.shape
    np.testing.assert_allclose(np.asarray(out2), np.asarray(ref2),
                               rtol=rtol, atol=atol,
                               err_msg="gridded-forward mismatch vs reference (T=13)")

    print("KERNEL_OK")
</pallas_src>

<mosaic_0001>
module attributes {stable_mosaic.version = 11 : i64} {
  func.func @_attention_kernel(%arg0: i32, %arg1: memref<2x8x32xf32, #tpu.memory_space<vmem>>, %arg2: memref<2x32xf32, #tpu.memory_space<vmem>>, %arg3: memref<32x32xf32, #tpu.memory_space<vmem>>, %arg4: memref<32x32xf32, #tpu.memory_space<vmem>>, %arg5: memref<1x32xf32, #tpu.memory_space<vmem>>, %arg6: memref<2x32xf32, #tpu.memory_space<vmem>>, %arg7: memref<2x32xf32, #tpu.memory_space<vmem>>) attributes {dimension_semantics = [#tpu.dimension_semantics<arbitrary>], iteration_bounds = array<i64: 1>, scalar_prefetch = 0 : i64, scratch_operands = 1 : i64, tpu.core_type = #tpu.core_type<tc>, window_params = [{transform_indices = @transform_0, window_bounds = array<i64: 2, 8, 32>}, {pipeline_mode = #tpu.pipeline_mode<synchronous>, transform_indices = @transform_1, window_bounds = array<i64: 2, 32>}, {pipeline_mode = #tpu.pipeline_mode<synchronous>, transform_indices = @transform_2, window_bounds = array<i64: 32, 32>}, {pipeline_mode = #tpu.pipeline_mode<synchronous>, transform_indices = @transform_3, window_bounds = array<i64: 32, 32>}, {pipeline_mode = #tpu.pipeline_mode<synchronous>, transform_indices = @transform_4, window_bounds = array<i64: 1, 32>}, {pipeline_mode = #tpu.pipeline_mode<synchronous>, transform_indices = @transform_5, window_bounds = array<i64: 2, 32>}]} {
    %c0_i32 = arith.constant 0 : i32
    %0 = arith.cmpi eq, %arg0, %c0_i32 : i32
    %1 = arith.extui %0 : i1 to i32
    %c0_i32_0 = arith.constant 0 : i32
    %2 = arith.cmpi ne, %1, %c0_i32_0 : i32
    scf.if %2 {
      %cst_12 = arith.constant 0.000000e+00 : f32
      %16 = vector.broadcast %cst_12 : f32 to vector<2x32xf32>
      %c0_13 = arith.constant 0 : index
      %c0_14 = arith.constant 0 : index
      %17 = vector.load %arg7[%c0_13, %c0_14] : memref<2x32xf32, #tpu.memory_space<vmem>>, vector<2x32xf32>
      tpu.vector_store %arg7[%c0_13, %c0_14], %16 {strides = array<i32>} : memref<2x32xf32, #tpu.memory_space<vmem>>, vector<2x32xf32>,
    } else {
    }
    %c0 = arith.constant 0 : index
    %c0_1 = arith.constant 0 : index
    %c0_2 = arith.constant 0 : index
    %3 = vector.load %arg1[%c0, %c0_1, %c0_2] : memref<2x8x32xf32, #tpu.memory_space<vmem>>, vector<2x8x32xf32>
    %c0_3 = arith.constant 0 : index
    %c0_4 = arith.constant 0 : index
    %4 = vector.load %arg3[%c0_3, %c0_4] : memref<32x32xf32, #tpu.memory_space<vmem>>, vector<32x32xf32>
    %5 = vector.shape_cast %4 : vector<32x32xf32> to vector<1x32x32xf32>
    %6 = vector.broadcast %5 : vector<1x32x32xf32> to vector<2x32x32xf32>
    "tpu.trace_start"() <{level = 10 : i32, message = "bth,bhk->btk"}> : () -> ()
    %cst = arith.constant dense<0.000000e+00> : vector<2x8x32xf32>
    %7 = tpu.matmul %3, %6, %cst {dimension_numbers = #tpu.dot_dimension_numbers<[2], [1], [1], [2], [0, 0, 0, 1, 1, 2], [0], [0]>} : vector<2x8x32xf32>, vector<2x32x32xf32>, vector<2x8x32xf32> -> vector<2x8x32xf32>
    "tpu.trace_stop"() : () -> ()
    %8 = math.exp %7 : vector<2x8x32xf32>
    %c0_5 = arith.constant 0 : index
    %c0_6 = arith.constant 0 : index
    %9 = vector.load %arg7[%c0_5, %c0_6] : memref<2x32xf32, #tpu.memory_space<vmem>>, vector<2x32xf32>
    %cst_7 = arith.constant dense<0.000000e+00> : vector<2x32xf32>
    %10 = vector.multi_reduction <add>, %8, %cst_7 [1] : vector<2x8x32xf32> to vector<2x32xf32>
    %11 = arith.addf %9, %10 : vector<2x32xf32>
    %c0_8 = arith.constant 0 : index
    %c0_9 = arith.constant 0 : index
    %12 = vector.load %arg7[%c0_8, %c0_9] : memref<2x32xf32, #tpu.memory_space<vmem>>, vector<2x32xf32>
    tpu.vector_store %arg7[%c0_8, %c0_9], %11 {strides = array<i32>} : memref<2x32xf32, #tpu.memory_space<vmem>>, vector<2x32xf32>,
    %c0_i32_10 = arith.constant 0 : i32
    %13 = arith.cmpi eq, %arg0, %c0_i32_10 : i32
    %14 = arith.extui %13 : i1 to i32
    %c0_i32_11 = arith.constant 0 : i32
    %15 = arith.cmpi ne, %14, %c0_i32_11 : i32
    scf.if %15 {
      %c0_12 = arith.constant 0 : index
      %c0_13 = arith.constant 0 : index
      %16 = vector.load %arg2[%c0_12, %c0_13] : memref<2x32xf32, #tpu.memory_space<vmem>>, vector<2x32xf32>
      %c0_14 = arith.constant 0 : index
      %c0_15 = arith.constant 0 : index
      %17 = vector.load %arg4[%c0_14, %c0_15] : memref<32x32xf32, #tpu.memory_space<vmem>>, vector<32x32xf32>
      %cst_16 = arith.constant dense<0.000000e+00> : vector<2x32xf32>
      %18 = tpu.matmul %16, %17, %cst_16 {dimension_numbers = #tpu.dot_dimension_numbers<[1], [0], [0], [1], [0, 0, 1, 1], [], []>} : vector<2x32xf32>, vector<32x32xf32>, vector<2x32xf32> -> vector<2x32xf32>
      %c0_17 = arith.constant 0 : index
      %c0_18 = arith.constant 0 : index
      %19 = vector.load %arg5[%c0_17, %c0_18] : memref<1x32xf32, #tpu.memory_space<vmem>>, vector<1x32xf32>
      %20 = vector.broadcast %19 : vector<1x32xf32> to vector<2x32xf32>
      %21 = arith.addf %18, %20 : vector<2x32xf32>
      %22 = math.tanh %21 : vector<2x32xf32>
      %cst_19 = arith.constant dense<0.000000e+00> : vector<2x32xf32>
      %23 = tpu.matmul %22, %4, %cst_19 {dimension_numbers = #tpu.dot_dimension_numbers<[1], [0], [0], [1], [0, 0, 1, 1], [], []>} : vector<2x32xf32>, vector<32x32xf32>, vector<2x32xf32> -> vector<2x32xf32>
      %24 = math.exp %23 : vector<2x32xf32>
      %c0_20 = arith.constant 0 : index
      %c0_21 = arith.constant 0 : index
      %25 = vector.load %arg7[%c0_20, %c0_21] : memref<2x32xf32, #tpu.memory_space<vmem>>, vector<2x32xf32>
      %26 = arith.divf %24, %25 : vector<2x32xf32>
      %27 = arith.mulf %26, %16 : vector<2x32xf32>
      %c0_22 = arith.constant 0 : index
      %c0_23 = arith.constant 0 : index
      %28 = vector.load %arg6[%c0_22, %c0_23] : memref<2x32xf32, #tpu.memory_space<vmem>>, vector<2x32xf32>
      tpu.vector_store %arg6[%c0_22, %c0_23], %27 {strides = array<i32>} : memref<2x32xf32, #tpu.memory_space<vmem>>, vector<2x32xf32>,
    } else {
    }
    return
  }
  func.func @transform_0(%arg0: i32) -> (i32, i32, i32) {
    %c0_i32 = arith.constant 0 : i32
    %c0_i32_0 = arith.constant 0 : i32
    %c0_i32_1 = arith.constant 0 : i32
    return %c0_i32, %arg0, %c0_i32_0 : i32, i32, i32
  }
  func.func @transform_1(%arg0: i32) -> (i32, i32) {
    %c0_i32 = arith.constant 0 : i32
    %c0_i32_0 = arith.constant 0 : i32
    %c0_i32_1 = arith.constant 0 : i32
    return %c0_i32, %c0_i32_0 : i32, i32
  }
  func.func @transform_2(%arg0: i32) -> (i32, i32) {
    %c0_i32 = arith.constant 0 : i32
    %c0_i32_0 = arith.constant 0 : i32
    %c0_i32_1 = arith.constant 0 : i32
    return %c0_i32, %c0_i32_0 : i32, i32
  }
  func.func @transform_3(%arg0: i32) -> (i32, i32) {
    %c0_i32 = arith.constant 0 : i32
    %c0_i32_0 = arith.constant 0 : i32
    %c0_i32_1 = arith.constant 0 : i32
    return %c0_i32, %c0_i32_0 : i32, i32
  }
  func.func @transform_4(%arg0: i32) -> (i32, i32) {
    %c0_i32 = arith.constant 0 : i32
    %c0_i32_0 = arith.constant 0 : i32
    %c0_i32_1 = arith.constant 0 : i32
    return %c0_i32, %c0_i32_0 : i32, i32
  }
  func.func @transform_5(%arg0: i32) -> (i32, i32) {
    %c0_i32 = arith.constant 0 : i32
    %c0_i32_0 = arith.constant 0 : i32
    %c0_i32_1 = arith.constant 0 : i32
    return %c0_i32, %c0_i32_0 : i32, i32
  }
}

</mosaic_0001>

<llo_original>
// kernel: attention_forward.1
$region0: #{attention_forward.1}
  #allocation0 [shape = 'u32[]', space=smem, size = 0x4, offset = 0x4, fixed_abs, tag = 'smem constant byte address 0x4 - core index']
  #allocation1 [shape = 'u32[144,128]{1,0:T(1,128)}', space=vmem, size = 0x12000, scoped, tag = 'internal scratch']
  #allocation2 [shape = 'f32[2,32]{1,0:T(2,128)}', space=vmem, size = 0x400, scoped, tag = 'scratch operand']
  %s0 = inlined_call_operand.vmem [shape: f32[2,8,32], index: 0, kind: input, shape index: {}]
  %s1 = inlined_call_operand.vmem [shape: f32[2,32], index: 1, kind: input, shape index: {}]
  %s2 = inlined_call_operand.vmem [shape: f32[32,32], index: 2, kind: input, shape index: {}]
  %s3 = inlined_call_operand.vmem [shape: f32[32,32], index: 3, kind: input, shape index: {}]
  %s4 = inlined_call_operand.vmem [shape: f32[1,32], index: 4, kind: input, shape index: {}]
  %s5 = inlined_call_operand.hbm [shape: f32[2,32], index: 5, kind: output, shape index: {}]
  %s6 = sld [smem:[#allocation0]]
  $region38: #{attention_forward.1} parent=0
    _
  %s8 = ssub.s32 1, %s6
  %s9 = scalar_select 0, %s8, %s6
  $region1: #{attention_forward.1} parent=0
    #allocation3 [shape = 'u8[1024]{0}', space=vmem, size = 0x400, scoped, tag = 'output window, operand 0, single buffered']
    #allocation4 [shape = 's32[1]{0}', space=sflag, size = 0x4, scoped, tag = 'scoped memory for attention_forward.1']
    %10 = vsyncpa [#allocation4], 0
    // Predicated region
    $region2: #{attention_forward.1} parent=1 // pred_check
      _
    $region3: #{attention_forward.1} parent=1 // pred_check_branch
      %12 = sbr.rel (0) target = $region5
    $region4: #{attention_forward.1} parent=1 // pred_region
      _
    $region5: #{attention_forward.1} parent=1 // pred_fallthru
      _
    // Predicated region
    $region6: #{attention_forward.1} parent=1 // pred_check
      _
    $region7: #{attention_forward.1} parent=1 // pred_check_branch
      %14 = sbr.rel (0) target = $region9
    $region8: #{attention_forward.1} parent=1 // pred_region
      _
    $region9: #{attention_forward.1} parent=1 // pred_fallthru
      _
    // Predicated region
    $region10: #{attention_forward.1} parent=1 // pred_check
      _
    $region11: #{attention_forward.1} parent=1 // pred_check_branch
      %16 = sbr.rel (0) target = $region13
    $region12: #{attention_forward.1} parent=1 // pred_region
      _
    $region13: #{attention_forward.1} parent=1 // pred_fallthru
      _
    // Predicated region
    $region14: #{attention_forward.1} parent=1 // pred_check
      _
    $region15: #{attention_forward.1} parent=1 // pred_check_branch
      %18 = sbr.rel (0) target = $region17
    $region16: #{attention_forward.1} parent=1 // pred_region
      _
    $region17: #{attention_forward.1} parent=1 // pred_fallthru
      _
    // Predicated region
    $region18: #{attention_forward.1} parent=1 // pred_check
      _
    $region19: #{attention_forward.1} parent=1 // pred_check_branch
      %20 = sbr.rel (0) target = $region21
    $region20: #{attention_forward.1} parent=1 // pred_region
      _
    $region21: #{attention_forward.1} parent=1 // pred_fallthru
      _
    %p21 = scmp.eq.s32.totalorder 0, 0
    // Predicated region
    $region22: #{attention_forward.1} parent=1 // pred_check
      %p22 = pneg %p21
    $region23: #{attention_forward.1} parent=1 // pred_check_branch
      %24 = sbr.rel (%p22) target = $region25
    $region24: #{attention_forward.1} parent=1 // pred_region
      %vm25 = vcmask 254976
      %26 = vst.msk [vmem:[#allocation2] sm:$0x3] %vm25, 0.0
    $region25: #{attention_forward.1} parent=1 // pred_fallthru
      _
    %v27 = vld [vmem:[%s0] sm:$0xff]
    %v28 = vld [vmem:[%s0 + $0x8] sm:$0xff]
    %v29 = vld [vmem:[%s2] sm:$0xff]
    %v30 = vld [vmem:[%s2 + $0x8] sm:$0xff]
    %v31 = vld [vmem:[%s2 + $0x10] sm:$0xff]
    %v32 = vld [vmem:[%s2 + $0x18] sm:$0xff]
    %vm33 = vcmask 261120
    %v35 = vsel %vm33, %v27, 0
    %37 = vmatprep.subr.mxu0 0.0
    %38 = vmatpush1.msra.mxu0 %v29
    %39 = vmatprep.subr.mxu0 0.0
    %40 = vmatpush1.msra.mxu0 %v30
    %41 = vmatprep.subr.mxu0 0.0
    %42 = vmatpush1.msra.mxu0 %v31
    %43 = vmatprep.subr.mxu0 0.0
    %44 = vmatpush1.msra.mxu0 %v32
    %45 = vmatprep.subr.mxu0 0.0
    %46 = vmatpush1.msra.mxu0 0.0
    %47 = vmatprep.subr.mxu0 0.0
    %48 = vmatpush1.msra.mxu0 0.0
    %49 = vmatprep.subr.mxu0 0.0
    %50 = vmatpush1.msra.mxu0 0.0
    %51 = vmatprep.subr.mxu0 0.0
    %52 = vmatpush1.msra.mxu0 0.0
    %53 = vmatprep.subr.mxu0 0.0
    %54 = vmatpush1.msra.mxu0 0.0
    %55 = vmatprep.subr.mxu0 0.0
    %56 = vmatpush1.msra.mxu0 0.0
    %57 = vmatprep.subr.mxu0 0.0
    %58 = vmatpush1.msra.mxu0 0.0
    %59 = vmatprep.subr.mxu0 0.0
    %60 = vmatpush1.msra.mxu0 0.0
    %61 = vmatprep.subr.mxu0 0.0
    %62 = vmatpush1.msra.mxu0 0.0
    %63 = vmatprep.subr.mxu0 0.0
    %64 = vmatpush1.msra.mxu0 0.0
    %65 = vmatprep.subr.mxu0 0.0
    %66 = vmatpush1.msra.mxu0 0.0
    %67 = vmatprep.subr.mxu0 0.0
    %68 = vmatpush1.msra.mxu0 0.0
    %69 = vmatprep.subr.mxu0 0.0
    %70 = vmatpush1.msra.mxu0 0.0
    %71 = vmatprep.subr.mxu0 0.0
    %72 = vmatpush1.msra.mxu0 0.0
    %73 = vmatprep.subr.mxu0 0.0
    %74 = vmatpush1.msra.mxu0 0.0
    %75 = vmatprep.subr.mxu0 0.0
    %76 = vmatpush1.msra.mxu0 0.0
    %77 = vmatprep.subr.mxu0 0.0
    %78 = vmatpush1.msra.mxu0 0.0
    %79 = vmatprep.subr.mxu0 0.0
    %80 = vmatpush1.msra.mxu0 0.0
    %81 = vmatprep.subr.mxu0 0.0
    %82 = vmatpush1.msra.mxu0 0.0
    %83 = vmatprep.subr.mxu0 0.0
    %84 = vmatpush1.msra.mxu0 0.0
    %85 = vmatprep.subr.mxu0 0.0
    %86 = vmatpush1.msra.mxu0 0.0
    %87 = vmatprep.subr.mxu0 0.0
    %88 = vmatpush1.msra.mxu0 0.0
    %89 = vmatprep.subr.mxu0 0.0
    %90 = vmatpush1.msra.mxu0 0.0
    %91 = vmatprep.subr.mxu0 0.0
    %92 = vmatpush1.msra.mxu0 0.0
    %93 = vmatprep.subr.mxu0 0.0
    %94 = vmatpush1.msra.mxu0 0.0
    %95 = vmatprep.subr.mxu0 0.0
    %96 = vmatpush1.msra.mxu0 0.0
    %97 = vmatprep.subr.mxu0 0.0
    %98 = vmatpush1.msra.mxu0 0.0
    %99 = vmatprep.subr.mxu0 0.0
    %100 = vmatpush1.msra.mxu0 0.0
    %101 = vmatprep.mubr.f32.mxu0 0.0
    %102 = vmatmul.mubr.f32.gmra.mrb[0].mxu0 %v35
    %v103 = vpop.f32.mrb[0].mxu0
    %v104 = vadd.f32 0.0, %v103
    %v105 = vpop.f32.mrb[0].mxu0
    %106 = vdwg.mxu0
    %v108 = vsel %vm33, %v28, 0
    %110 = vmatprep.subr.mxu0 0.0
    %111 = vmatpush1.msra.mxu0 %v29
    %112 = vmatprep.subr.mxu0 0.0
    %113 = vmatpush1.msra.mxu0 %v30
    %114 = vmatprep.subr.mxu0 0.0
    %115 = vmatpush1.msra.mxu0 %v31
    %116 = vmatprep.subr.mxu0 0.0
    %117 = vmatpush1.msra.mxu0 %v32
    %118 = vmatprep.subr.mxu0 0.0
    %119 = vmatpush1.msra.mxu0 0.0
    %120 = vmatprep.subr.mxu0 0.0
    %121 = vmatpush1.msra.mxu0 0.0
    %122 = vmatprep.subr.mxu0 0.0
    %123 = vmatpush1.msra.mxu0 0.0
    %124 = vmatprep.subr.mxu0 0.0
    %125 = vmatpush1.msra.mxu0 0.0
    %126 = vmatprep.subr.mxu0 0.0
    %127 = vmatpush1.msra.mxu0 0.0
    %128 = vmatprep.subr.mxu0 0.0
    %129 = vmatpush1.msra.mxu0 0.0
    %130 = vmatprep.subr.mxu0 0.0
    %131 = vmatpush1.msra.mxu0 0.0
    %132 = vmatprep.subr.mxu0 0.0
    %133 = vmatpush1.msra.mxu0 0.0
    %134 = vmatprep.subr.mxu0 0.0
    %135 = vmatpush1.msra.mxu0 0.0
    %136 = vmatprep.subr.mxu0 0.0
    %137 = vmatpush1.msra.mxu0 0.0
    %138 = vmatprep.subr.mxu0 0.0
    %139 = vmatpush1.msra.mxu0 0.0
    %140 = vmatprep.subr.mxu0 0.0
    %141 = vmatpush1.msra.mxu0 0.0
    %142 = vmatprep.subr.mxu0 0.0
    %143 = vmatpush1.msra.mxu0 0.0
    %144 = vmatprep.subr.mxu0 0.0
    %145 = vmatpush1.msra.mxu0 0.0
    %146 = vmatprep.subr.mxu0 0.0
    %147 = vmatpush1.msra.mxu0 0.0
    %148 = vmatprep.subr.mxu0 0.0
    %149 = vmatpush1.msra.mxu0 0.0
    %150 = vmatprep.subr.mxu0 0.0
    %151 = vmatpush1.msra.mxu0 0.0
    %152 = vmatprep.subr.mxu0 0.0
    %153 = vmatpush1.msra.mxu0 0.0
    %154 = vmatprep.subr.mxu0 0.0
    %155 = vmatpush1.msra.mxu0 0.0
    %156 = vmatprep.subr.mxu0 0.0
    %157 = vmatpush1.msra.mxu0 0.0
    %158 = vmatprep.subr.mxu0 0.0
    %159 = vmatpush1.msra.mxu0 0.0
    %160 = vmatprep.subr.mxu0 0.0
    %161 = vmatpush1.msra.mxu0 0.0
    %162 = vmatprep.subr.mxu0 0.0
    %163 = vmatpush1.msra.mxu0 0.0
    %164 = vmatprep.subr.mxu0 0.0
    %165 = vmatpush1.msra.mxu0 0.0
    %166 = vmatprep.subr.mxu0 0.0
    %167 = vmatpush1.msra.mxu0 0.0
    %168 = vmatprep.subr.mxu0 0.0
    %169 = vmatpush1.msra.mxu0 0.0
    %170 = vmatprep.subr.mxu0 0.0
    %171 = vmatpush1.msra.mxu0 0.0
    %172 = vmatprep.subr.mxu0 0.0
    %173 = vmatpush1.msra.mxu0 0.0
    %174 = vmatprep.mubr.f32.mxu0 0.0
    %175 = vmatmul.mubr.f32.gmra.mrb[0].mxu0 %v108
    %v176 = vpop.f32.mrb[0].mxu0
    %v177 = vadd.f32 0.0, %v176
    %v178 = vpop.f32.mrb[0].mxu0
    %179 = vdwg.mxu0
    %v180 = vmul.f32 %v104, 1.442695
    %v181 = vpow.pop %v180
    %v182 = vmul.f32 %v177, 1.442695
    %v183 = vpow.pop %v182
    %v184 = vld [vmem:[#allocation2] sm:$0x3]
    %v185 = vsel %vm33, %v181, 0.0
    %v186 = vrot.slane %v185, 4
    %v187 = vadd.f32 %v185, %v186
    %v188 = vrot.slane %v187, 2
    %v189 = vadd.f32 %v187, %v188
    %v190 = vrot.slane %v189, 1
    %v191 = vadd.f32 %v189, %v190
    %v192 = vsel %vm33, %v183, 0.0
    %v193 = vrot.slane %v192, 4
    %v194 = vadd.f32 %v192, %v193
    %v195 = vrot.slane %v194, 2
    %v196 = vadd.f32 %v194, %v195
    %v197 = vrot.slane %v196, 1
    %v198 = vadd.f32 %v196, %v197
    %vm201 = vcmask 1041409
    %v202 = vsel %vm201, %v198, %v191
    %v204 = vadd.f32 %v184, %v202
    %vm205 = vcmask 254976
    %206 = vst.msk [vmem:[#allocation2] sm:$0x3] %vm205, %v204
    // Predicated region
    $region26: #{attention_forward.1} parent=1 // pred_check
      %p207 = pneg %p21
    $region27: #{attention_forward.1} parent=1 // pred_check_branch
      %209 = sbr.rel (%p207) target = $region29
    $region28: #{attention_forward.1} parent=1 // pred_region
      %v210 = vld [vmem:[%s1] sm:$0x3]
      %v211 = vld [vmem:[%s3] sm:$0xff]
      %v212 = vld [vmem:[%s3 + $0x8] sm:$0xff]
      %v213 = vld [vmem:[%s3 + $0x10] sm:$0xff]
      %v214 = vld [vmem:[%s3 + $0x18] sm:$0xff]
      %v215 = vld [vmem:[%s4] sm:$0x1]
      %v217 = vlaneseq
      %v218 = vshrl.u32 %v217, 7
      %v219 = vsub.s32 0, %v218
      %v220 = vrot.slane %v215, %v219
      %v223 = vsel %vm33, %v210, 0
      %225 = vmatprep.subr.mxu0 0.0
      %226 = vmatpush1.msra.mxu0 %v211
      %227 = vmatprep.subr.mxu0 0.0
      %228 = vmatpush1.msra.mxu0 %v212
      %229 = vmatprep.subr.mxu0 0.0
      %230 = vmatpush1.msra.mxu0 %v213
      %231 = vmatprep.subr.mxu0 0.0
      %232 = vmatpush1.msra.mxu0 %v214
      %233 = vmatprep.subr.mxu0 0.0
      %234 = vmatpush1.msra.mxu0 0.0
      %235 = vmatprep.subr.mxu0 0.0
      %236 = vmatpush1.msra.mxu0 0.0
      %237 = vmatprep.subr.mxu0 0.0
      %238 = vmatpush1.msra.mxu0 0.0
      %239 = vmatprep.subr.mxu0 0.0
      %240 = vmatpush1.msra.mxu0 0.0
      %241 = vmatprep.subr.mxu0 0.0
      %242 = vmatpush1.msra.mxu0 0.0
      %243 = vmatprep.subr.mxu0 0.0
      %244 = vmatpush1.msra.mxu0 0.0
      %245 = vmatprep.subr.mxu0 0.0
      %246 = vmatpush1.msra.mxu0 0.0
      %247 = vmatprep.subr.mxu0 0.0
      %248 = vmatpush1.msra.mxu0 0.0
      %249 = vmatprep.subr.mxu0 0.0
      %250 = vmatpush1.msra.mxu0 0.0
      %251 = vmatprep.subr.mxu0 0.0
      %252 = vmatpush1.msra.mxu0 0.0
      %253 = vmatprep.subr.mxu0 0.0
      %254 = vmatpush1.msra.mxu0 0.0
      %255 = vmatprep.subr.mxu0 0.0
      %256 = vmatpush1.msra.mxu0 0.0
      %257 = vmatprep.subr.mxu0 0.0
      %258 = vmatpush1.msra.mxu0 0.0
      %259 = vmatprep.subr.mxu0 0.0
      %260 = vmatpush1.msra.mxu0 0.0
      %261 = vmatprep.subr.mxu0 0.0
      %262 = vmatpush1.msra.mxu0 0.0
      %263 = vmatprep.subr.mxu0 0.0
      %264 = vmatpush1.msra.mxu0 0.0
      %265 = vmatprep.subr.mxu0 0.0
      %266 = vmatpush1.msra.mxu0 0.0
      %267 = vmatprep.subr.mxu0 0.0
      %268 = vmatpush1.msra.mxu0 0.0
      %269 = vmatprep.subr.mxu0 0.0
      %270 = vmatpush1.msra.mxu0 0.0
      %271 = vmatprep.subr.mxu0 0.0
      %272 = vmatpush1.msra.mxu0 0.0
      %273 = vmatprep.subr.mxu0 0.0
      %274 = vmatpush1.msra.mxu0 0.0
      %275 = vmatprep.subr.mxu0 0.0
      %276 = vmatpush1.msra.mxu0 0.0
      %277 = vmatprep.subr.mxu0 0.0
      %278 = vmatpush1.msra.mxu0 0.0
      %279 = vmatprep.subr.mxu0 0.0
      %280 = vmatpush1.msra.mxu0 0.0
      %281 = vmatprep.subr.mxu0 0.0
      %282 = vmatpush1.msra.mxu0 0.0
      %283 = vmatprep.subr.mxu0 0.0
      %284 = vmatpush1.msra.mxu0 0.0
      %285 = vmatprep.subr.mxu0 0.0
      %286 = vmatpush1.msra.mxu0 0.0
      %287 = vmatprep.subr.mxu0 0.0
      %288 = vmatpush1.msra.mxu0 0.0
      %289 = vmatprep.mubr.f32.mxu0 0.0
      %290 = vmatmul.mubr.f32.gmra.mrb[0].mxu0 %v223
      %v291 = vpop.f32.mrb[0].mxu0
      %v292 = vadd.f32 %v220, %v291
      %v293 = vpop.f32.mrb[0].mxu0
      %294 = vdwg.mxu0
      %v295 = vtanh.pop %v292
      %v297 = vsel %vm33, %v295, 0
      %299 = vmatprep.subr.mxu0 0.0
      %300 = vmatpush1.msra.mxu0 %v29
      %301 = vmatprep.subr.mxu0 0.0
      %302 = vmatpush1.msra.mxu0 %v30
      %303 = vmatprep.subr.mxu0 0.0
      %304 = vmatpush1.msra.mxu0 %v31
      %305 = vmatprep.subr.mxu0 0.0
      %306 = vmatpush1.msra.mxu0 %v32
      %307 = vmatprep.subr.mxu0 0.0
      %308 = vmatpush1.msra.mxu0 0.0
      %309 = vmatprep.subr.mxu0 0.0
      %310 = vmatpush1.msra.mxu0 0.0
      %311 = vmatprep.subr.mxu0 0.0
      %312 = vmatpush1.msra.mxu0 0.0
      %313 = vmatprep.subr.mxu0 0.0
      %314 = vmatpush1.msra.mxu0 0.0
      %315 = vmatprep.subr.mxu0 0.0
      %316 = vmatpush1.msra.mxu0 0.0
      %317 = vmatprep.subr.mxu0 0.0
      %318 = vmatpush1.msra.mxu0 0.0
      %319 = vmatprep.subr.mxu0 0.0
      %320 = vmatpush1.msra.mxu0 0.0
      %321 = vmatprep.subr.mxu0 0.0
      %322 = vmatpush1.msra.mxu0 0.0
      %323 = vmatprep.subr.mxu0 0.0
      %324 = vmatpush1.msra.mxu0 0.0
      %325 = vmatprep.subr.mxu0 0.0
      %326 = vmatpush1.msra.mxu0 0.0
      %327 = vmatprep.subr.mxu0 0.0
      %328 = vmatpush1.msra.mxu0 0.0
      %329 = vmatprep.subr.mxu0 0.0
      %330 = vmatpush1.msra.mxu0 0.0
      %331 = vmatprep.subr.mxu0 0.0
      %332 = vmatpush1.msra.mxu0 0.0
      %333 = vmatprep.subr.mxu0 0.0
      %334 = vmatpush1.msra.mxu0 0.0
      %335 = vmatprep.subr.mxu0 0.0
      %336 = vmatpush1.msra.mxu0 0.0
      %337 = vmatprep.subr.mxu0 0.0
      %338 = vmatpush1.msra.mxu0 0.0
      %339 = vmatprep.subr.mxu0 0.0
      %340 = vmatpush1.msra.mxu0 0.0
      %341 = vmatprep.subr.mxu0 0.0
      %342 = vmatpush1.msra.mxu0 0.0
      %343 = vmatprep.subr.mxu0 0.0
      %344 = vmatpush1.msra.mxu0 0.0
      %345 = vmatprep.subr.mxu0 0.0
      %346 = vmatpush1.msra.mxu0 0.0
      %347 = vmatprep.subr.mxu0 0.0
      %348 = vmatpush1.msra.mxu0 0.0
      %349 = vmatprep.subr.mxu0 0.0
      %350 = vmatpush1.msra.mxu0 0.0
      %351 = vmatprep.subr.mxu0 0.0
      %352 = vmatpush1.msra.mxu0 0.0
      %353 = vmatprep.subr.mxu0 0.0
      %354 = vmatpush1.msra.mxu0 0.0
      %355 = vmatprep.subr.mxu0 0.0
      %356 = vmatpush1.msra.mxu0 0.0
      %357 = vmatprep.subr.mxu0 0.0
      %358 = vmatpush1.msra.mxu0 0.0
      %359 = vmatprep.subr.mxu0 0.0
      %360 = vmatpush1.msra.mxu0 0.0
      %361 = vmatprep.subr.mxu0 0.0
      %362 = vmatpush1.msra.mxu0 0.0
      %363 = vmatprep.mubr.f32.mxu0 0.0
      %364 = vmatmul.mubr.f32.gmra.mrb[0].mxu0 %v297
      %v365 = vpop.f32.mrb[0].mxu0
      %v366 = vadd.f32 0.0, %v365
      %v367 = vpop.f32.mrb[0].mxu0
      %368 = vdwg.mxu0
      %v369 = vmul.f32 %v366, 1.442695
      %v370 = vpow.pop %v369
      %v371 = vld [vmem:[#allocation2] sm:$0x3]
      %v372 = vrcp.pop %v371
      %v373 = vmul.f32 %v370, %v372
      %v374 = vmul.f32 %v373, %v210
      %375 = vst.msk [vmem:[#allocation3] sm:$0x3] %vm205, %v374
    $region29: #{attention_forward.1} parent=1 // pred_fallthru
      _
    // Predicated region
    $region30: #{attention_forward.1} parent=1 // pred_check
      _
    $region31: #{attention_forward.1} parent=1 // pred_check_branch
      %377 = sbr.rel (0) target = $region33
    $region32: #{attention_forward.1} parent=1 // pred_region
      %s379 = ssub.s32 32, 32
      %380 = vsyncadd [#allocation4], %s379
      %s382 = sshll.u32 [#allocation3], 4
      %s383 = int_to_ptr.vmem [resolvable:$true] %s382
      %385 = dma.vmem_to_hbm [thread:$0]  %s383, 32, %s5, [#allocation4]
    $region33: #{attention_forward.1} parent=1 // pred_fallthru
      _
    // Predicated region
    $region34: #{attention_forward.1} parent=1 // pred_check
      _
    $region35: #{attention_forward.1} parent=1 // pred_check_branch
      %387 = sbr.rel (0) target = $region37
    $region36: #{attention_forward.1} parent=1 // pred_region
      %388 = dma.done [#allocation4], 32
    $region37: #{attention_forward.1} parent=1 // pred_fallthru
      _
    %389 = vsyncpa [#allocation4], 1

</llo_original>
